<compile_context>
chip_gen: v7x
topology: tpu7x:2x2x1
jax: 0.10.0
libtpu: 0.0.40
codegen_flags: <defaults>
</compile_context>

<pallas_src>
import functools

import jax
import jax.numpy as jnp
from jax import lax
from jax.experimental import pallas as pl


# ----------------------------------------------------------------------------
# Shared in-kernel helper: stable BCE-with-logits + Tversky partial sums with
# a single exp per pixel (softplus and sigmoid both derived from it).
# ----------------------------------------------------------------------------
def _bce_tversky_stats(logit, y):
    e = jnp.exp(-jnp.abs(logit))                       # one EUP exp / pixel
    softplus = jnp.log1p(e)                            # one EUP log / pixel
    bce = jnp.maximum(logit, 0.0) - logit * y + softplus
    r = pl.reciprocal(1.0 + e, approx=True)            # EUP vrcp (approx)
    p = jnp.where(logit >= 0.0, r, e * r)              # sigmoid from shared exp
    bce_s = jnp.sum(bce, keepdims=True)                # (1, 1)
    tp = jnp.sum(p * y, keepdims=True)
    fp = jnp.sum((1.0 - y) * p, keepdims=True)
    fn = jnp.sum(y * (1.0 - p), keepdims=True)
    return bce_s, tp, fp, fn


# ----------------------------------------------------------------------------
# Fused Pallas kernels (grid-less; whole batch per call)
# ----------------------------------------------------------------------------
def _seg_kernel(x_ref, y_ref, selw_ref, bseg_ref, hr_ref, stats_ref):
    """encoder_q segmentation head + BCE / Focal-Tversky partial sums.

    x_ref:     (N*C, HW)  batch packed into sublanes, pixels on lanes
    y_ref:     (N, HW)    labels
    selw_ref:  (N, N*C)   block-diagonal 1x1-conv weights (per-sample head)
    bseg_ref:  (1, 1)
    hr_ref:    (N, HW)    logits (lane-dense, single store)
    stats_ref: (1, 128)   [bce_sum, tp, fp, fn, 0...] (single lane-dense store)
    """
    x = x_ref[...]
    y = y_ref[...]
    # Per-sample 1x1 conv over channels == one small block-diagonal matmul.
    hr = jnp.dot(selw_ref[...], x, preferred_element_type=jnp.float32)
    hr = hr + bseg_ref[...]
    hr_ref[...] = hr
    bce_s, tp, fp, fn = _bce_tversky_stats(hr, y)
    pad = jnp.zeros((1, 124), jnp.float32)
    stats_ref[...] = jnp.concatenate([bce_s, tp, fp, fn, pad], axis=-1)


def _train_lr_kernel(xqp_ref, xk_ref, y_ref, selw_ref, bseg_ref,
                     wq_ref, bq_ref, wk_ref, bk_ref, rsum_ref, queue_ref,
                     k_out_ref, stats_ref, *, inv_t, n):
    """Fully fused train_lr step for the whole batch.

    xqp_ref:   (N*C, HWp)  4x4-pooled query image (pooled in the wrapper)
    xk_ref:    (N*C, HW)   key image, lane-dense
    y_ref:     (N, HWp)    low-res label
    selw_ref:  (N, N*C)    block-diag seg-head weights of encoder_q
    bseg_ref:  (1, 1)
    wq_ref:    (N*C, DIM)  encoder_q projection weights, tiled over batch
    bq_ref:    (1, DIM)
    wk_ref:    (N*C, DIM)  encoder_k projection weights, tiled over batch
    bk_ref:    (1, DIM)
    rsum_ref:  (N, N*C)    block-diag ones: per-sample channel group-sum
    queue_ref: (K, DIM)    MoCo queue (already feature-on-lanes)
    k_out_ref: (N, DIM)    normalized key features (for enqueue)
    stats_ref: (1, 128)    [bce_sum, tp, fp, fn, infonce_mean, 0...]
    """
    xqp = xqp_ref[...]
    xk = xk_ref[...]
    y = y_ref[...]

    # Low-res seg head on the pooled query (AvgPool commutes with the linear
    # 1x1 conv, so pool-then-conv == conv-then-pool here).
    lr_logit = jnp.dot(selw_ref[...], xqp, preferred_element_type=jnp.float32)
    lr_logit = lr_logit + bseg_ref[...]

    # encoder_q: GAP -> projection -> l2 normalize.
    gap_q = jnp.mean(xqp, axis=-1, keepdims=True)                 # (N*C, 1)
    q = jnp.dot(rsum_ref[...], gap_q * wq_ref[...],
                preferred_element_type=jnp.float32) + bq_ref[...]  # (N, DIM)
    q = q * lax.rsqrt(jnp.maximum(jnp.sum(q * q, axis=-1, keepdims=True), 1e-24))

    # encoder_k (momentum) feature.
    gap_k = jnp.mean(xk, axis=-1, keepdims=True)                  # (N*C, 1)
    k = jnp.dot(rsum_ref[...], gap_k * wk_ref[...],
                preferred_element_type=jnp.float32) + bk_ref[...]  # (N, DIM)
    k = k * lax.rsqrt(jnp.maximum(jnp.sum(k * k, axis=-1, keepdims=True), 1e-24))
    k_out_ref[...] = k

    # MoCo InfoNCE with target index 0: logits = [q.k, q @ queue^T] / T.
    s_pos = jnp.sum(q * k, axis=-1, keepdims=True) * inv_t                   # (N, 1)
    s_neg = lax.dot_general(q, queue_ref[...], (((1,), (1,)), ((), ())),
                            preferred_element_type=jnp.float32) * inv_t      # (N, K)
    m = jnp.maximum(s_pos, jnp.max(s_neg, axis=-1, keepdims=True))
    lse = m + jnp.log(jnp.exp(s_pos - m)
                      + jnp.sum(jnp.exp(s_neg - m), axis=-1, keepdims=True))
    tc = jnp.sum(lse - s_pos, keepdims=True) * (1.0 / n)                     # (1, 1)

    bce_s, tp, fp, fn = _bce_tversky_stats(lr_logit, y)
    pad = jnp.zeros((1, 123), jnp.float32)
    stats_ref[...] = jnp.concatenate([bce_s, tp, fp, fn, tc, pad], axis=-1)


# ----------------------------------------------------------------------------
# Wrappers
# ----------------------------------------------------------------------------
def _focal_tversky(stats):
    tp, fp, fn = stats[0, 1], stats[0, 2], stats[0, 3]
    tversky = (tp + 1.0) / (tp + 0.4 * fp + 0.6 * fn + 1.0)
    return jnp.sqrt(jnp.maximum(1.0 - tversky, 0.0))      # gamma = 0.5


def seg_forward(params, image, label):
    """Fused encoder_q + segmentation losses. Returns (hr_pre, bce, focal_tversky)."""
    n, c, h, w = image.shape
    hw = h * w
    x = image.reshape(n * c, hw).astype(jnp.float32)       # batch packed on sublanes
    y = label.reshape(n, hw).astype(jnp.float32)
    sel_w = jnp.kron(jnp.eye(n, dtype=jnp.float32), params["w_seg"].T)   # (N, N*C)

    hr, stats = pl.pallas_call(
        _seg_kernel,
        out_shape=[
            jax.ShapeDtypeStruct((n, hw), jnp.float32),
            jax.ShapeDtypeStruct((1, 128), jnp.float32),
        ],
        cost_estimate=pl.CostEstimate(
            flops=int(2 * n * (n * c) * hw + 14 * n * hw),
            transcendentals=int(3 * n * hw),
            bytes_accessed=int(4 * (n * c * hw + 3 * n * hw + 128))),
    )(x, y, sel_w, params["b_seg"])

    hr_pre = hr.reshape(n, 1, h, w)
    bce = stats[0, 0] / (n * hw)
    return hr_pre, bce, _focal_tversky(stats)


def train_lr_forward(params_q, params_k, queue_kd, im_q, im_k, lr_label, temperature):
    """Fused train_lr hot path. Returns (k_features, lr_bce, lr_ft, tc_loss)."""
    n, c, h, w = im_q.shape
    hp, wp = h // 4, w // 4
    hwp, hw = hp * wp, h * w
    dim = params_q["w_proj"].shape[1]
    kq = queue_kd.shape[0]

    # 4x4 AvgPool of the query image: one XLA reshape+mean pass (no patch
    # transpose, no 16-lane layout). Legal before the linear 1x1-conv head.
    xq_pool = (im_q.reshape(n, c, hp, 4, wp, 4).mean(axis=(3, 5))
               .reshape(n * c, hwp).astype(jnp.float32))
    xk = im_k.reshape(n * c, hw).astype(jnp.float32)
    y = lr_label.reshape(n, hwp).astype(jnp.float32)

    eye = jnp.eye(n, dtype=jnp.float32)
    sel_w = jnp.kron(eye, params_q["w_seg"].T)                # (N, N*C)
    rsum = jnp.kron(eye, jnp.ones((1, c), jnp.float32))       # (N, N*C) group-sum
    wq_tiled = jnp.tile(params_q["w_proj"], (n, 1))           # (N*C, DIM)
    wk_tiled = jnp.tile(params_k["w_proj"], (n, 1))

    kernel = functools.partial(_train_lr_kernel,
                               inv_t=float(1.0 / temperature), n=n)
    k_feat, stats = pl.pallas_call(
        kernel,
        out_shape=[
            jax.ShapeDtypeStruct((n, dim), jnp.float32),
            jax.ShapeDtypeStruct((1, 128), jnp.float32),
        ],
        cost_estimate=pl.CostEstimate(
            flops=int(2 * n * (n * c) * (hwp + 2 * dim) + 2 * n * dim * kq
                      + 14 * n * hwp + n * c * (hw + hwp)),
            transcendentals=int(3 * n * hwp + n * (kq + 4)),
            bytes_accessed=int(4 * (n * c * (hw + hwp) + n * hwp + kq * dim
                                    + 2 * n * c * dim + n * dim + 128))),
    )(xq_pool, xk, y, sel_w, params_q["b_seg"],
      wq_tiled, params_q["b_proj"], wk_tiled, params_k["b_proj"],
      rsum, queue_kd.astype(jnp.float32))

    bce = stats[0, 0] / (n * hwp)
    return k_feat, bce, _focal_tversky(stats), stats[0, 4]


# ----------------------------------------------------------------------------
# Framework (mirrors the PyTorch module semantics)
# ----------------------------------------------------------------------------
class MultiDataTrainFrameworkWTC:
    def __init__(self, key, in_channels=4, dim=32, K=16, m=0.999, T=0.07,
                 out_size=(16, 16)):
        self.K = K
        self.m = m
        self.T = T
        self.out_size = out_size

        k1, k2, k3 = jax.random.split(key, 3)
        self.params_q = {
            "w_seg": 0.1 * jax.random.normal(k1, (in_channels, 1), jnp.float32),
            "b_seg": jnp.zeros((1, 1), jnp.float32),
            "w_proj": 0.1 * jax.random.normal(k2, (in_channels, dim), jnp.float32),
            "b_proj": jnp.zeros((1, dim), jnp.float32),
        }
        # encoder_k starts identical to encoder_q (arrays are immutable in JAX,
        # so sharing references is equivalent to PyTorch's deep copy here).
        self.params_k = jax.tree_util.tree_map(lambda p: p, self.params_q)
        # MoCo queue stored persistently TRANSPOSED as (K, dim), l2-normalized
        # along the feature axis (same semantics as randn(dim, K) normalized
        # along dim 0); avoids a per-call transpose on the critical path.
        q0 = jax.random.normal(k3, (K, dim), jnp.float32)
        self.queue = q0 / jnp.maximum(
            jnp.linalg.norm(q0, axis=1, keepdims=True), 1e-12)
        self.queue_ptr = 0

    # -- @torch.no_grad() helpers ---------------------------------------------
    def _momentum_update_key_encoder(self):
        self.params_k = jax.tree_util.tree_map(
            lambda pk, pq: pk * self.m + pq * (1.0 - self.m),
            self.params_k, self.params_q)

    def _dequeue_and_enqueue(self, keys):
        batch_size = keys.shape[0]
        assert self.K % batch_size == 0  # keeps ptr + batch <= K (no clamping)
        ptr = int(self.queue_ptr)
        self.queue = jax.lax.dynamic_update_slice(self.queue, keys, (ptr, 0))
        self.queue_ptr = (ptr + batch_size) % self.K

    # -- forward ----------------------------------------------------------------
    def forward(self, inp, mode):
        if mode == "train_hr":
            hr_pre, bce, ft = seg_forward(self.params_q, inp["image"], inp["label"])
            return {"hr_loss": bce + 0.5 * ft}, hr_pre

        elif mode == "train_lr":
            # "with torch.no_grad():" momentum update (encoder_q unaffected).
            self._momentum_update_key_encoder()
            k_feat, bce, ft, tc = train_lr_forward(
                self.params_q, self.params_k, self.queue,
                inp["image"], inp["image_tc"], inp["label"], self.T)
            self._dequeue_and_enqueue(k_feat)

            lr_bce_loss = bce + 0.5 * ft
            # TODO(synk): loss.SRLoss(0.45, 0.097) is an external, undefined loss;
            # returned as 0 here rather than fabricating its semantics.
            lr_sr_loss = jnp.float32(0.0)
            return {"lr_bce_loss": 1.0 * lr_bce_loss,
                    "lr_sr_loss": 0.025 * lr_sr_loss,
                    "tc_loss": 0.005 * tc}

        elif mode == "val":
            hr_pre, bce, _ = seg_forward(self.params_q, inp["image"], inp["label"])
            return {"loss": bce}, hr_pre, inp["label"]

        else:
            raise ValueError(f"unknown mode {mode}")


# ----------------------------------------------------------------------------
# Main
# ----------------------------------------------------------------------------
if __name__ == "__main__":
    key = jax.random.PRNGKey(0)
    k_model, k_img, k_tc, k_llr, k_lhr = jax.random.split(key, 5)

    N, C, H, W = 2, 4, 16, 16
    DIM, K = 32, 16

    model = MultiDataTrainFrameworkWTC(
        k_model, in_channels=C, dim=DIM, K=K, m=0.999, T=0.07, out_size=(H, W))

    image = jax.random.normal(k_img, (N, C, H, W), jnp.float32)
    image_tc = jax.random.normal(k_tc, (N, C, H, W), jnp.float32)
    lr_label = (jax.random.uniform(k_llr, (N, 1, H // 4, W // 4)) > 0.5
                ).astype(jnp.float32)
    hr_label = (jax.random.uniform(k_lhr, (N, 1, H, W)) > 0.5).astype(jnp.float32)

    # train_lr: fused MoCo contrastive path + pooled segmentation losses.
    losses_lr = model.forward(
        {"image": image, "image_tc": image_tc, "label": lr_label}, "train_lr")
    jax.block_until_ready(losses_lr)

    # train_hr: fused full-resolution segmentation losses.
    losses_hr, hr_pre = model.forward(
        {"image": image, "label": hr_label}, "train_hr")
    jax.block_until_ready((losses_hr, hr_pre))

    # val
    val_out = model.forward({"image": image, "label": hr_label}, "val")
    jax.block_until_ready(val_out)

    print("KERNEL_OK")
</pallas_src>

<mosaic_0001>
module attributes {stable_mosaic.version = 11 : i64} {
  func.func @_train_lr_kernel(%arg0: memref<8x16xf32, #tpu.memory_space<vmem>>, %arg1: memref<8x256xf32, #tpu.memory_space<vmem>>, %arg2: memref<2x16xf32, #tpu.memory_space<vmem>>, %arg3: memref<2x8xf32, #tpu.memory_space<vmem>>, %arg4: memref<1x1xf32, #tpu.memory_space<vmem>>, %arg5: memref<8x32xf32, #tpu.memory_space<vmem>>, %arg6: memref<1x32xf32, #tpu.memory_space<vmem>>, %arg7: memref<8x32xf32, #tpu.memory_space<vmem>>, %arg8: memref<1x32xf32, #tpu.memory_space<vmem>>, %arg9: memref<2x8xf32, #tpu.memory_space<vmem>>, %arg10: memref<16x32xf32, #tpu.memory_space<vmem>>, %arg11: memref<2x32xf32, #tpu.memory_space<vmem>>, %arg12: memref<1x128xf32, #tpu.memory_space<vmem>>) attributes {dimension_semantics = [], scalar_prefetch = 0 : i64, scratch_operands = 0 : i64, tpu.core_type = #tpu.core_type<tc>} {
    %c0 = arith.constant 0 : index
    %c0_0 = arith.constant 0 : index
    %0 = vector.load %arg0[%c0, %c0_0] : memref<8x16xf32, #tpu.memory_space<vmem>>, vector<8x16xf32>
    %c0_1 = arith.constant 0 : index
    %c0_2 = arith.constant 0 : index
    %1 = vector.load %arg1[%c0_1, %c0_2] : memref<8x256xf32, #tpu.memory_space<vmem>>, vector<8x256xf32>
    %c0_3 = arith.constant 0 : index
    %c0_4 = arith.constant 0 : index
    %2 = vector.load %arg2[%c0_3, %c0_4] : memref<2x16xf32, #tpu.memory_space<vmem>>, vector<2x16xf32>
    %c0_5 = arith.constant 0 : index
    %c0_6 = arith.constant 0 : index
    %3 = vector.load %arg3[%c0_5, %c0_6] : memref<2x8xf32, #tpu.memory_space<vmem>>, vector<2x8xf32>
    %cst = arith.constant dense<0.000000e+00> : vector<2x16xf32>
    %4 = tpu.matmul %3, %0, %cst {dimension_numbers = #tpu.dot_dimension_numbers<[1], [0], [0], [1], [0, 0, 1, 1], [], []>} : vector<2x8xf32>, vector<8x16xf32>, vector<2x16xf32> -> vector<2x16xf32>
    %c0_7 = arith.constant 0 : index
    %c0_8 = arith.constant 0 : index
    %5 = vector.load %arg4[%c0_7, %c0_8] : memref<1x1xf32, #tpu.memory_space<vmem>>, vector<1x1xf32>
    %6 = vector.broadcast %5 : vector<1x1xf32> to vector<2x16xf32>
    %7 = arith.addf %4, %6 : vector<2x16xf32>
    %cst_9 = arith.constant dense<0.000000e+00> : vector<8xf32>
    %8 = vector.multi_reduction <add>, %0, %cst_9 [1] : vector<8x16xf32> to vector<8xf32>
    %9 = vector.shape_cast %8 : vector<8xf32> to vector<8x1xf32>
    %cst_10 = arith.constant 1.600000e+01 : f32
    %10 = vector.broadcast %cst_10 : f32 to vector<8x1xf32>
    %11 = arith.divf %9, %10 : vector<8x1xf32>
    %c0_11 = arith.constant 0 : index
    %c0_12 = arith.constant 0 : index
    %12 = vector.load %arg9[%c0_11, %c0_12] : memref<2x8xf32, #tpu.memory_space<vmem>>, vector<2x8xf32>
    %c0_13 = arith.constant 0 : index
    %c0_14 = arith.constant 0 : index
    %13 = vector.load %arg5[%c0_13, %c0_14] : memref<8x32xf32, #tpu.memory_space<vmem>>, vector<8x32xf32>
    %14 = vector.broadcast %11 : vector<8x1xf32> to vector<8x32xf32>
    %15 = arith.mulf %14, %13 : vector<8x32xf32>
    %cst_15 = arith.constant dense<0.000000e+00> : vector<2x32xf32>
    %16 = tpu.matmul %12, %15, %cst_15 {dimension_numbers = #tpu.dot_dimension_numbers<[1], [0], [0], [1], [0, 0, 1, 1], [], []>} : vector<2x8xf32>, vector<8x32xf32>, vector<2x32xf32> -> vector<2x32xf32>
    %c0_16 = arith.constant 0 : index
    %c0_17 = arith.constant 0 : index
    %17 = vector.load %arg6[%c0_16, %c0_17] : memref<1x32xf32, #tpu.memory_space<vmem>>, vector<1x32xf32>
    %18 = vector.broadcast %17 : vector<1x32xf32> to vector<2x32xf32>
    %19 = arith.addf %16, %18 : vector<2x32xf32>
    %20 = arith.mulf %19, %19 : vector<2x32xf32>
    %cst_18 = arith.constant dense<0.000000e+00> : vector<2xf32>
    %21 = vector.multi_reduction <add>, %20, %cst_18 [1] : vector<2x32xf32> to vector<2xf32>
    %22 = vector.shape_cast %21 : vector<2xf32> to vector<2x1xf32>
    %cst_19 = arith.constant 1.000000e-24 : f32
    %23 = vector.broadcast %cst_19 : f32 to vector<2x1xf32>
    %24 = arith.maximumf %22, %23 : vector<2x1xf32>
    %25 = math.rsqrt %24 : vector<2x1xf32>
    %26 = vector.broadcast %25 : vector<2x1xf32> to vector<2x32xf32>
    %27 = arith.mulf %19, %26 : vector<2x32xf32>
    %cst_20 = arith.constant dense<0.000000e+00> : vector<8xf32>
    %28 = vector.multi_reduction <add>, %1, %cst_20 [1] : vector<8x256xf32> to vector<8xf32>
    %29 = vector.shape_cast %28 : vector<8xf32> to vector<8x1xf32>
    %cst_21 = arith.constant 2.560000e+02 : f32
    %30 = vector.broadcast %cst_21 : f32 to vector<8x1xf32>
    %31 = arith.divf %29, %30 : vector<8x1xf32>
    %c0_22 = arith.constant 0 : index
    %c0_23 = arith.constant 0 : index
    %32 = vector.load %arg9[%c0_22, %c0_23] : memref<2x8xf32, #tpu.memory_space<vmem>>, vector<2x8xf32>
    %c0_24 = arith.constant 0 : index
    %c0_25 = arith.constant 0 : index
    %33 = vector.load %arg7[%c0_24, %c0_25] : memref<8x32xf32, #tpu.memory_space<vmem>>, vector<8x32xf32>
    %34 = vector.broadcast %31 : vector<8x1xf32> to vector<8x32xf32>
    %35 = arith.mulf %34, %33 : vector<8x32xf32>
    %cst_26 = arith.constant dense<0.000000e+00> : vector<2x32xf32>
    %36 = tpu.matmul %32, %35, %cst_26 {dimension_numbers = #tpu.dot_dimension_numbers<[1], [0], [0], [1], [0, 0, 1, 1], [], []>} : vector<2x8xf32>, vector<8x32xf32>, vector<2x32xf32> -> vector<2x32xf32>
    %c0_27 = arith.constant 0 : index
    %c0_28 = arith.constant 0 : index
    %37 = vector.load %arg8[%c0_27, %c0_28] : memref<1x32xf32, #tpu.memory_space<vmem>>, vector<1x32xf32>
    %38 = vector.broadcast %37 : vector<1x32xf32> to vector<2x32xf32>
    %39 = arith.addf %36, %38 : vector<2x32xf32>
    %40 = arith.mulf %39, %39 : vector<2x32xf32>
    %cst_29 = arith.constant dense<0.000000e+00> : vector<2xf32>
    %41 = vector.multi_reduction <add>, %40, %cst_29 [1] : vector<2x32xf32> to vector<2xf32>
    %42 = vector.shape_cast %41 : vector<2xf32> to vector<2x1xf32>
    %cst_30 = arith.constant 1.000000e-24 : f32
    %43 = vector.broadcast %cst_30 : f32 to vector<2x1xf32>
    %44 = arith.maximumf %42, %43 : vector<2x1xf32>
    %45 = math.rsqrt %44 : vector<2x1xf32>
    %46 = vector.broadcast %45 : vector<2x1xf32> to vector<2x32xf32>
    %47 = arith.mulf %39, %46 : vector<2x32xf32>
    %c0_31 = arith.constant 0 : index
    %c0_32 = arith.constant 0 : index
    %48 = vector.load %arg11[%c0_31, %c0_32] : memref<2x32xf32, #tpu.memory_space<vmem>>, vector<2x32xf32>
    tpu.vector_store %arg11[%c0_31, %c0_32], %47 {strides = array<i32>} : memref<2x32xf32, #tpu.memory_space<vmem>>, vector<2x32xf32>,
    %49 = arith.mulf %27, %47 : vector<2x32xf32>
    %cst_33 = arith.constant dense<0.000000e+00> : vector<2xf32>
    %50 = vector.multi_reduction <add>, %49, %cst_33 [1] : vector<2x32xf32> to vector<2xf32>
    %51 = vector.shape_cast %50 : vector<2xf32> to vector<2x1xf32>
    %cst_34 = arith.constant 14.2857141 : f32
    %52 = vector.broadcast %cst_34 : f32 to vector<2x1xf32>
    %53 = arith.mulf %51, %52 : vector<2x1xf32>
    %c0_35 = arith.constant 0 : index
    %c0_36 = arith.constant 0 : index
    %54 = vector.load %arg10[%c0_35, %c0_36] : memref<16x32xf32, #tpu.memory_space<vmem>>, vector<16x32xf32>
    %cst_37 = arith.constant dense<0.000000e+00> : vector<2x16xf32>
    %55 = tpu.matmul %27, %54, %cst_37 {dimension_numbers = #tpu.dot_dimension_numbers<[1], [1], [0], [0], [0, 0, 1, 0], [], []>} : vector<2x32xf32>, vector<16x32xf32>, vector<2x16xf32> -> vector<2x16xf32>
    %cst_38 = arith.constant 14.2857141 : f32
    %56 = vector.broadcast %cst_38 : f32 to vector<2x16xf32>
    %57 = arith.mulf %55, %56 : vector<2x16xf32>
    %cst_39 = arith.constant dense<0xFF800000> : vector<2xf32>
    %58 = vector.multi_reduction <maximumf>, %57, %cst_39 [1] : vector<2x16xf32> to vector<2xf32>
    %59 = vector.shape_cast %58 : vector<2xf32> to vector<2x1xf32>
    %60 = arith.maximumf %53, %59 : vector<2x1xf32>
    %61 = arith.subf %53, %60 : vector<2x1xf32>
    %62 = math.exp %61 : vector<2x1xf32>
    %63 = vector.broadcast %60 : vector<2x1xf32> to vector<2x16xf32>
    %64 = arith.subf %57, %63 : vector<2x16xf32>
    %65 = math.exp %64 : vector<2x16xf32>
    %cst_40 = arith.constant dense<0.000000e+00> : vector<2xf32>
    %66 = vector.multi_reduction <add>, %65, %cst_40 [1] : vector<2x16xf32> to vector<2xf32>
    %67 = vector.shape_cast %66 : vector<2xf32> to vector<2x1xf32>
    %68 = arith.addf %62, %67 : vector<2x1xf32>
    %69 = math.log %68 : vector<2x1xf32>
    %70 = arith.addf %60, %69 : vector<2x1xf32>
    %71 = arith.subf %70, %53 : vector<2x1xf32>
    %72 = vector.shape_cast %71 : vector<2x1xf32> to vector<1x2x1xf32>
    %cst_41 = arith.constant dense<0.000000e+00> : vector<1xf32>
    %73 = vector.multi_reduction <add>, %72, %cst_41 [1, 2] : vector<1x2x1xf32> to vector<1xf32>
    %74 = vector.shape_cast %73 : vector<1xf32> to vector<1x1x1xf32>
    %75 = vector.extract %74[0, 0, 0] : f32 from vector<1x1x1xf32>
    %76 = vector.broadcast %75 : f32 to vector<1x1xf32>
    %cst_42 = arith.constant 5.000000e-01 : f32
    %77 = vector.broadcast %cst_42 : f32 to vector<1x1xf32>
    %78 = arith.mulf %76, %77 : vector<1x1xf32>
    %79 = math.absf %7 : vector<2x16xf32>
    %cst_43 = arith.constant 0.000000e+00 : f32
    %80 = vector.broadcast %cst_43 : f32 to vector<2x16xf32>
    %81 = arith.subf %80, %79 : vector<2x16xf32>
    %82 = math.exp %81 : vector<2x16xf32>
    %83 = math.log1p %82 : vector<2x16xf32>
    %cst_44 = arith.constant 0.000000e+00 : f32
    %84 = vector.broadcast %cst_44 : f32 to vector<2x16xf32>
    %85 = arith.maximumf %7, %84 : vector<2x16xf32>
    %86 = arith.mulf %7, %2 : vector<2x16xf32>
    %87 = arith.subf %85, %86 : vector<2x16xf32>
    %88 = arith.addf %87, %83 : vector<2x16xf32>
    %cst_45 = arith.constant 1.000000e+00 : f32
    %89 = vector.broadcast %cst_45 : f32 to vector<2x16xf32>
    %90 = arith.addf %89, %82 : vector<2x16xf32>
    %91 = tpu.reciprocal %90 {approx = true} : vector<2x16xf32> -> vector<2x16xf32>
    %cst_46 = arith.constant 0.000000e+00 : f32
    %92 = vector.broadcast %cst_46 : f32 to vector<2x16xf32>
    %93 = arith.cmpf oge, %7, %92 : vector<2x16xf32>
    %94 = arith.mulf %82, %91 : vector<2x16xf32>
    %95 = arith.select %93, %91, %94 : vector<2x16xi1>, vector<2x16xf32>
    %96 = vector.shape_cast %88 : vector<2x16xf32> to vector<1x2x16xf32>
    %cst_47 = arith.constant dense<0.000000e+00> : vector<1xf32>
    %97 = vector.multi_reduction <add>, %96, %cst_47 [1, 2] : vector<1x2x16xf32> to vector<1xf32>
    %98 = vector.shape_cast %97 : vector<1xf32> to vector<1x1x1xf32>
    %99 = vector.extract %98[0, 0, 0] : f32 from vector<1x1x1xf32>
    %100 = vector.broadcast %99 : f32 to vector<1x1xf32>
    %101 = arith.mulf %95, %2 : vector<2x16xf32>
    %102 = vector.shape_cast %101 : vector<2x16xf32> to vector<1x2x16xf32>
    %cst_48 = arith.constant dense<0.000000e+00> : vector<1xf32>
    %103 = vector.multi_reduction <add>, %102, %cst_48 [1, 2] : vector<1x2x16xf32> to vector<1xf32>
    %104 = vector.shape_cast %103 : vector<1xf32> to vector<1x1x1xf32>
    %105 = vector.extract %104[0, 0, 0] : f32 from vector<1x1x1xf32>
    %106 = vector.broadcast %105 : f32 to vector<1x1xf32>
    %cst_49 = arith.constant 1.000000e+00 : f32
    %107 = vector.broadcast %cst_49 : f32 to vector<2x16xf32>
    %108 = arith.subf %107, %2 : vector<2x16xf32>
    %109 = arith.mulf %108, %95 : vector<2x16xf32>
    %110 = vector.shape_cast %109 : vector<2x16xf32> to vector<1x2x16xf32>
    %cst_50 = arith.constant dense<0.000000e+00> : vector<1xf32>
    %111 = vector.multi_reduction <add>, %110, %cst_50 [1, 2] : vector<1x2x16xf32> to vector<1xf32>
    %112 = vector.shape_cast %111 : vector<1xf32> to vector<1x1x1xf32>
    %113 = vector.extract %112[0, 0, 0] : f32 from vector<1x1x1xf32>
    %114 = vector.broadcast %113 : f32 to vector<1x1xf32>
    %cst_51 = arith.constant 1.000000e+00 : f32
    %115 = vector.broadcast %cst_51 : f32 to vector<2x16xf32>
    %116 = arith.subf %115, %95 : vector<2x16xf32>
    %117 = arith.mulf %2, %116 : vector<2x16xf32>
    %118 = vector.shape_cast %117 : vector<2x16xf32> to vector<1x2x16xf32>
    %cst_52 = arith.constant dense<0.000000e+00> : vector<1xf32>
    %119 = vector.multi_reduction <add>, %118, %cst_52 [1, 2] : vector<1x2x16xf32> to vector<1xf32>
    %120 = vector.shape_cast %119 : vector<1xf32> to vector<1x1x1xf32>
    %121 = vector.extract %120[0, 0, 0] : f32 from vector<1x1x1xf32>
    %122 = vector.broadcast %121 : f32 to vector<1x1xf32>
    %cst_53 = arith.constant 0.000000e+00 : f32
    %123 = vector.broadcast %cst_53 : f32 to vector<1x123xf32>
    %124 = tpu.concatenate %100, %106, %114, %122, %78, %123 in 1 : vector<1x1xf32>, vector<1x1xf32>, vector<1x1xf32>, vector<1x1xf32>, vector<1x1xf32>, vector<1x123xf32> -> vector<1x128xf32>
    %c0_54 = arith.constant 0 : index
    %c0_55 = arith.constant 0 : index
    %125 = vector.load %arg12[%c0_54, %c0_55] : memref<1x128xf32, #tpu.memory_space<vmem>>, vector<1x128xf32>
    tpu.vector_store %arg12[%c0_54, %c0_55], %124 {strides = array<i32>} : memref<1x128xf32, #tpu.memory_space<vmem>>, vector<1x128xf32>,
    return
  }
}

</mosaic_0001>

<llo_original>
// kernel: tpu_custom_call.1
$region0: #{tpu_custom_call.1}
  #allocation0 [shape = 'u32[]', space=smem, size = 0x4, offset = 0x4, fixed_abs, tag = 'smem constant byte address 0x4 - core index']
  #allocation1 [shape = 'u32[144,128]{1,0:T(1,128)}', space=vmem, size = 0x12000, scoped, tag = 'internal scratch']
  #allocation2 [shape = 'f32[1,1]{1,0:T(1,128)S(1)}', space=vmem, size = 0x200, scoped, tag = 'scoped memory for tpu_custom_call.1']
  %s0 = inlined_call_operand.hbm [shape: f32[8,16], index: 0, kind: input, shape index: {}]
  %s1 = inlined_call_operand.hbm [shape: f32[8,256], index: 1, kind: input, shape index: {}]
  %s2 = inlined_call_operand.vmem [shape: f32[2,16], index: 2, kind: input, shape index: {}]
  %s3 = inlined_call_operand.vmem [shape: f32[2,8], index: 3, kind: input, shape index: {}]
  %s4 = inlined_call_operand.<no memory space> [shape: f32[1,1], index: 4, kind: input, shape index: {}]
  %s5 = inlined_call_operand.vmem [shape: f32[8,32], index: 5, kind: input, shape index: {}]
  %s6 = inlined_call_operand.hbm [shape: f32[1,32], index: 6, kind: input, shape index: {}]
  %s7 = inlined_call_operand.hbm [shape: f32[8,32], index: 7, kind: input, shape index: {}]
  %s8 = inlined_call_operand.hbm [shape: f32[1,32], index: 8, kind: input, shape index: {}]
  %s9 = inlined_call_operand.vmem [shape: f32[2,8], index: 9, kind: input, shape index: {}]
  %s10 = inlined_call_operand.vmem [shape: f32[16,32], index: 10, kind: input, shape index: {}]
  %s11 = inlined_call_operand.hbm [shape: f32[2,32], index: 11, kind: output, shape index: {0}]
  %s12 = inlined_call_operand.hbm [shape: f32[1,128], index: 12, kind: output, shape index: {1}]
  %13 = xla_tuple %s11, %s12
  %s14 = sld [smem:[#allocation0]]
  $region82: #{tpu_custom_call.1} parent=0
    _
  %s16 = ssub.s32 1, %s14
  %s17 = scalar_select 0, %s16, %s14
  %v18 = vstv %s4
  %19 = vst [vmem:[#allocation2] sm:$0x1] %v18
  $region1: #{tpu_custom_call.1} parent=0
    #allocation3 [shape = 'u8[4096]{0}', space=vmem, size = 0x1000, scoped, tag = 'input window, operand 0, single buffered']
    #allocation4 [shape = 's32[1]{0}', space=sflag, size = 0x4, scoped, tag = 'scoped memory for tpu_custom_call.1']
    #allocation5 [shape = 's32[1]{0}', space=sflag, size = 0x4, scoped, tag = 'scoped memory for tpu_custom_call.1']
    #allocation6 [shape = 'u8[8192]{0}', space=vmem, size = 0x2000, scoped, tag = 'input window, operand 1, single buffered']
    #allocation7 [shape = 's32[1]{0}', space=sflag, size = 0x4, scoped, tag = 'scoped memory for tpu_custom_call.1']
    #allocation8 [shape = 'u8[512]{0}', space=vmem, size = 0x400, scoped, tag = 'input window, operand 6, single buffered']
    #allocation9 [shape = 'u8[4096]{0}', space=vmem, size = 0x1000, scoped, tag = 'input window, operand 7, single buffered']
    #allocation10 [shape = 's32[1]{0}', space=sflag, size = 0x4, scoped, tag = 'scoped memory for tpu_custom_call.1']
    #allocation11 [shape = 'u8[512]{0}', space=vmem, size = 0x400, scoped, tag = 'input window, operand 8, single buffered']
    #allocation12 [shape = 'u8[1024]{0}', space=vmem, size = 0x400, scoped, tag = 'output window, operand 0, single buffered']
    #allocation13 [shape = 'u8[512]{0}', space=vmem, size = 0x400, scoped, tag = 'output window, operand 1, single buffered']
    #allocation14 [shape = 's32[1]{0}', space=sflag, size = 0x4, scoped, tag = 'scoped memory for tpu_custom_call.1']
    %20 = vsyncpa [#allocation4], 0
    %21 = vsyncpa [#allocation7], 0
    %22 = vsyncpa [#allocation10], 0
    %23 = vsyncpa [#allocation5], 0
    %24 = vsyncpa [#allocation14], 0
    // Predicated region
    $region2: #{tpu_custom_call.1} parent=1 // pred_check
      _
    $region3: #{tpu_custom_call.1} parent=1 // pred_check_branch
      %26 = sbr.rel (0) target = $region5
    $region4: #{tpu_custom_call.1} parent=1 // pred_region
      %s28 = ssub.s32 128, 128
      %29 = vsyncadd [#allocation4], %s28
      %s31 = sshll.u32 [#allocation3], 4
      %s32 = int_to_ptr.vmem [resolvable:$true] %s31
      %34 = dma.hbm_to_vmem [thread:$0]  %s0, 128, %s32, [#allocation4]
    $region5: #{tpu_custom_call.1} parent=1 // pred_fallthru
      _
    // Predicated region
    $region6: #{tpu_custom_call.1} parent=1 // pred_check
      _
    $region7: #{tpu_custom_call.1} parent=1 // pred_check_branch
      %36 = sbr.rel (0) target = $region9
    $region8: #{tpu_custom_call.1} parent=1 // pred_region
      %s38 = ssub.s32 256, 256
      %39 = vsyncadd [#allocation7], %s38
      %s41 = sshll.u32 [#allocation6], 4
      %s42 = int_to_ptr.vmem [resolvable:$true] %s41
      %44 = dma.hbm_to_vmem [thread:$0]  %s1, 256, %s42, [#allocation7]
    $region9: #{tpu_custom_call.1} parent=1 // pred_fallthru
      _
    // Predicated region
    $region10: #{tpu_custom_call.1} parent=1 // pred_check
      _
    $region11: #{tpu_custom_call.1} parent=1 // pred_check_branch
      %46 = sbr.rel (0) target = $region13
    $region12: #{tpu_custom_call.1} parent=1 // pred_region
      _
    $region13: #{tpu_custom_call.1} parent=1 // pred_fallthru
      _
    // Predicated region
    $region14: #{tpu_custom_call.1} parent=1 // pred_check
      _
    $region15: #{tpu_custom_call.1} parent=1 // pred_check_branch
      %48 = sbr.rel (0) target = $region17
    $region16: #{tpu_custom_call.1} parent=1 // pred_region
      _
    $region17: #{tpu_custom_call.1} parent=1 // pred_fallthru
      _
    // Predicated region
    $region18: #{tpu_custom_call.1} parent=1 // pred_check
      _
    $region19: #{tpu_custom_call.1} parent=1 // pred_check_branch
      %50 = sbr.rel (0) target = $region21
    $region20: #{tpu_custom_call.1} parent=1 // pred_region
      _
    $region21: #{tpu_custom_call.1} parent=1 // pred_fallthru
      _
    // Predicated region
    $region22: #{tpu_custom_call.1} parent=1 // pred_check
      _
    $region23: #{tpu_custom_call.1} parent=1 // pred_check_branch
      %52 = sbr.rel (0) target = $region25
    $region24: #{tpu_custom_call.1} parent=1 // pred_region
      _
    $region25: #{tpu_custom_call.1} parent=1 // pred_fallthru
      _
    // Predicated region
    $region26: #{tpu_custom_call.1} parent=1 // pred_check
      _
    $region27: #{tpu_custom_call.1} parent=1 // pred_check_branch
      %54 = sbr.rel (0) target = $region29
    $region28: #{tpu_custom_call.1} parent=1 // pred_region
      %s56 = ssub.s32 16, 16
      %57 = vsyncadd [#allocation7], %s56
      %s59 = sshll.u32 [#allocation8], 4
      %s60 = int_to_ptr.vmem [resolvable:$true] %s59
      %62 = dma.hbm_to_vmem [thread:$0]  %s6, 16, %s60, [#allocation7]
    $region29: #{tpu_custom_call.1} parent=1 // pred_fallthru
      _
    // Predicated region
    $region30: #{tpu_custom_call.1} parent=1 // pred_check
      _
    $region31: #{tpu_custom_call.1} parent=1 // pred_check_branch
      %64 = sbr.rel (0) target = $region33
    $region32: #{tpu_custom_call.1} parent=1 // pred_region
      %s66 = ssub.s32 128, 128
      %67 = vsyncadd [#allocation10], %s66
      %s69 = sshll.u32 [#allocation9], 4
      %s70 = int_to_ptr.vmem [resolvable:$true] %s69
      %72 = dma.hbm_to_vmem [thread:$0]  %s7, 128, %s70, [#allocation10]
    $region33: #{tpu_custom_call.1} parent=1 // pred_fallthru
      _
    // Predicated region
    $region34: #{tpu_custom_call.1} parent=1 // pred_check
      _
    $region35: #{tpu_custom_call.1} parent=1 // pred_check_branch
      %74 = sbr.rel (0) target = $region37
    $region36: #{tpu_custom_call.1} parent=1 // pred_region
      %s76 = ssub.s32 16, 16
      %77 = vsyncadd [#allocation10], %s76
      %s79 = sshll.u32 [#allocation11], 4
      %s80 = int_to_ptr.vmem [resolvable:$true] %s79
      %82 = dma.hbm_to_vmem [thread:$0]  %s8, 16, %s80, [#allocation10]
    $region37: #{tpu_custom_call.1} parent=1 // pred_fallthru
      _
    // Predicated region
    $region38: #{tpu_custom_call.1} parent=1 // pred_check
      _
    $region39: #{tpu_custom_call.1} parent=1 // pred_check_branch
      %84 = sbr.rel (0) target = $region41
    $region40: #{tpu_custom_call.1} parent=1 // pred_region
      _
    $region41: #{tpu_custom_call.1} parent=1 // pred_fallthru
      _
    // Predicated region
    $region42: #{tpu_custom_call.1} parent=1 // pred_check
      _
    $region43: #{tpu_custom_call.1} parent=1 // pred_check_branch
      %86 = sbr.rel (0) target = $region45
    $region44: #{tpu_custom_call.1} parent=1 // pred_region
      _
    $region45: #{tpu_custom_call.1} parent=1 // pred_fallthru
      _
    // Predicated region
    $region46: #{tpu_custom_call.1} parent=1 // pred_check
      _
    $region47: #{tpu_custom_call.1} parent=1 // pred_check_branch
      %88 = sbr.rel (0) target = $region49
    $region48: #{tpu_custom_call.1} parent=1 // pred_region
      %89 = dma.done [#allocation4], 128
    $region49: #{tpu_custom_call.1} parent=1 // pred_fallthru
      _
    // Predicated region
    $region50: #{tpu_custom_call.1} parent=1 // pred_check
      _
    $region51: #{tpu_custom_call.1} parent=1 // pred_check_branch
      %91 = sbr.rel (0) target = $region53
    $region52: #{tpu_custom_call.1} parent=1 // pred_region
      %92 = dma.done [#allocation7], 256
    $region53: #{tpu_custom_call.1} parent=1 // pred_fallthru
      _
    // Predicated region
    $region54: #{tpu_custom_call.1} parent=1 // pred_check
      _
    $region55: #{tpu_custom_call.1} parent=1 // pred_check_branch
      %94 = sbr.rel (0) target = $region57
    $region56: #{tpu_custom_call.1} parent=1 // pred_region
      %95 = dma.done [#allocation7], 16
    $region57: #{tpu_custom_call.1} parent=1 // pred_fallthru
      _
    // Predicated region
    $region58: #{tpu_custom_call.1} parent=1 // pred_check
      _
    $region59: #{tpu_custom_call.1} parent=1 // pred_check_branch
      %97 = sbr.rel (0) target = $region61
    $region60: #{tpu_custom_call.1} parent=1 // pred_region
      %98 = dma.done [#allocation10], 128
    $region61: #{tpu_custom_call.1} parent=1 // pred_fallthru
      _
    // Predicated region
    $region62: #{tpu_custom_call.1} parent=1 // pred_check
      _
    $region63: #{tpu_custom_call.1} parent=1 // pred_check_branch
      %100 = sbr.rel (0) target = $region65
    $region64: #{tpu_custom_call.1} parent=1 // pred_region
      %101 = dma.done [#allocation10], 16
    $region65: #{tpu_custom_call.1} parent=1 // pred_fallthru
      _
    %v102 = vld [vmem:[#allocation3] sm:$0xff]
    %v103 = vld [vmem:[#allocation6] sm:$0xff]
    %v104 = vld [vmem:[#allocation6 + $0x8] sm:$0xff]
    %v105 = vld [vmem:[%s2] sm:$0x3]
    %v106 = vld [vmem:[%s3] sm:$0x3]
    %v107 = vld [vmem:[#allocation2] sm:$0x1]
    %v109 = vlaneseq
    %v110 = vshrl.u32 %v109, 7
    %v111 = vsub.s32 0, %v110
    %v112 = vrot.slane %v107, %v111
    %113 = vset.pattern.permute.xlu0 0
    %114 = vperm.xlu0 %113, %v112
    %v115 = vpop.permute.xlu0 %114
    %vm117 = vcmask 64512
    %v119 = vsel %vm117, %v106, 0
    %121 = vmatprep.subr.mxu0 0.0
    %122 = vmatpush1.msra.mxu0 %v102
    %123 = vmatprep.subr.mxu0 0.0
    %124 = vmatpush1.msra.mxu0 0.0
    %125 = vmatprep.subr.mxu0 0.0
    %126 = vmatpush1.msra.mxu0 0.0
    %127 = vmatprep.subr.mxu0 0.0
    %128 = vmatpush1.msra.mxu0 0.0
    %129 = vmatprep.subr.mxu0 0.0
    %130 = vmatpush1.msra.mxu0 0.0
    %131 = vmatprep.subr.mxu0 0.0
    %132 = vmatpush1.msra.mxu0 0.0
    %133 = vmatprep.subr.mxu0 0.0
    %134 = vmatpush1.msra.mxu0 0.0
    %135 = vmatprep.subr.mxu0 0.0
    %136 = vmatpush1.msra.mxu0 0.0
    %137 = vmatprep.subr.mxu0 0.0
    %138 = vmatpush1.msra.mxu0 0.0
    %139 = vmatprep.subr.mxu0 0.0
    %140 = vmatpush1.msra.mxu0 0.0
    %141 = vmatprep.subr.mxu0 0.0
    %142 = vmatpush1.msra.mxu0 0.0
    %143 = vmatprep.subr.mxu0 0.0
    %144 = vmatpush1.msra.mxu0 0.0
    %145 = vmatprep.subr.mxu0 0.0
    %146 = vmatpush1.msra.mxu0 0.0
    %147 = vmatprep.subr.mxu0 0.0
    %148 = vmatpush1.msra.mxu0 0.0
    %149 = vmatprep.subr.mxu0 0.0
    %150 = vmatpush1.msra.mxu0 0.0
    %151 = vmatprep.subr.mxu0 0.0
    %152 = vmatpush1.msra.mxu0 0.0
    %153 = vmatprep.subr.mxu0 0.0
    %154 = vmatpush1.msra.mxu0 0.0
    %155 = vmatprep.subr.mxu0 0.0
    %156 = vmatpush1.msra.mxu0 0.0
    %157 = vmatprep.subr.mxu0 0.0
    %158 = vmatpush1.msra.mxu0 0.0
    %159 = vmatprep.subr.mxu0 0.0
    %160 = vmatpush1.msra.mxu0 0.0
    %161 = vmatprep.subr.mxu0 0.0
    %162 = vmatpush1.msra.mxu0 0.0
    %163 = vmatprep.subr.mxu0 0.0
    %164 = vmatpush1.msra.mxu0 0.0
    %165 = vmatprep.subr.mxu0 0.0
    %166 = vmatpush1.msra.mxu0 0.0
    %167 = vmatprep.subr.mxu0 0.0
    %168 = vmatpush1.msra.mxu0 0.0
    %169 = vmatprep.subr.mxu0 0.0
    %170 = vmatpush1.msra.mxu0 0.0
    %171 = vmatprep.subr.mxu0 0.0
    %172 = vmatpush1.msra.mxu0 0.0
    %173 = vmatprep.subr.mxu0 0.0
    %174 = vmatpush1.msra.mxu0 0.0
    %175 = vmatprep.subr.mxu0 0.0
    %176 = vmatpush1.msra.mxu0 0.0
    %177 = vmatprep.subr.mxu0 0.0
    %178 = vmatpush1.msra.mxu0 0.0
    %179 = vmatprep.subr.mxu0 0.0
    %180 = vmatpush1.msra.mxu0 0.0
    %181 = vmatprep.subr.mxu0 0.0
    %182 = vmatpush1.msra.mxu0 0.0
    %183 = vmatprep.subr.mxu0 0.0
    %184 = vmatpush1.msra.mxu0 0.0
    %185 = vmatprep.mubr.f32.mxu0 0.0
    %186 = vmatmul.mubr.f32.gmra.mrb[0].mxu0 %v119
    %v187 = vpop.f32.mrb[0].mxu0
    %v188 = vadd.f32 %v115, %v187
    %v189 = vpop.f32.mrb[0].mxu0
    %190 = vdwg.mxu0
    %vm191 = vcmask 130048
    %v192 = vsel %vm191, %v102, 0.0
    %193 = vadd.xlane.f32.xlu0 %v192
    %v194 = vpop.xlane.xlu0 %193
    %v195 = vrcp.pop 16.0
    %v196 = vmul.f32 %v194, %v195
    %v197 = vld [vmem:[%s9] sm:$0x3]
    %v198 = vld [vmem:[%s5] sm:$0xff]
    %v199 = vmul.f32 %v196, %v198
    %v200 = vld [vmem:[#allocation8] sm:$0x1]
    %v202 = vlaneseq
    %v203 = vshrl.u32 %v202, 7
    %v204 = vsub.s32 0, %v203
    %v205 = vrot.slane %v200, %v204
    %v208 = vsel %vm117, %v197, 0
    %210 = vmatprep.subr.mxu0 0.0
    %211 = vmatpush1.msra.mxu0 %v199
    %212 = vmatprep.subr.mxu0 0.0
    %213 = vmatpush1.msra.mxu0 0.0
    %214 = vmatprep.subr.mxu0 0.0
    %215 = vmatpush1.msra.mxu0 0.0
    %216 = vmatprep.subr.mxu0 0.0
    %217 = vmatpush1.msra.mxu0 0.0
    %218 = vmatprep.subr.mxu0 0.0
    %219 = vmatpush1.msra.mxu0 0.0
    %220 = vmatprep.subr.mxu0 0.0
    %221 = vmatpush1.msra.mxu0 0.0
    %222 = vmatprep.subr.mxu0 0.0
    %223 = vmatpush1.msra.mxu0 0.0
    %224 = vmatprep.subr.mxu0 0.0
    %225 = vmatpush1.msra.mxu0 0.0
    %226 = vmatprep.subr.mxu0 0.0
    %227 = vmatpush1.msra.mxu0 0.0
    %228 = vmatprep.subr.mxu0 0.0
    %229 = vmatpush1.msra.mxu0 0.0
    %230 = vmatprep.subr.mxu0 0.0
    %231 = vmatpush1.msra.mxu0 0.0
    %232 = vmatprep.subr.mxu0 0.0
    %233 = vmatpush1.msra.mxu0 0.0
    %234 = vmatprep.subr.mxu0 0.0
    %235 = vmatpush1.msra.mxu0 0.0
    %236 = vmatprep.subr.mxu0 0.0
    %237 = vmatpush1.msra.mxu0 0.0
    %238 = vmatprep.subr.mxu0 0.0
    %239 = vmatpush1.msra.mxu0 0.0
    %240 = vmatprep.subr.mxu0 0.0
    %241 = vmatpush1.msra.mxu0 0.0
    %242 = vmatprep.subr.mxu0 0.0
    %243 = vmatpush1.msra.mxu0 0.0
    %244 = vmatprep.subr.mxu0 0.0
    %245 = vmatpush1.msra.mxu0 0.0
    %246 = vmatprep.subr.mxu0 0.0
    %247 = vmatpush1.msra.mxu0 0.0
    %248 = vmatprep.subr.mxu0 0.0
    %249 = vmatpush1.msra.mxu0 0.0
    %250 = vmatprep.subr.mxu0 0.0
    %251 = vmatpush1.msra.mxu0 0.0
    %252 = vmatprep.subr.mxu0 0.0
    %253 = vmatpush1.msra.mxu0 0.0
    %254 = vmatprep.subr.mxu0 0.0
    %255 = vmatpush1.msra.mxu0 0.0
    %256 = vmatprep.subr.mxu0 0.0
    %257 = vmatpush1.msra.mxu0 0.0
    %258 = vmatprep.subr.mxu0 0.0
    %259 = vmatpush1.msra.mxu0 0.0
    %260 = vmatprep.subr.mxu0 0.0
    %261 = vmatpush1.msra.mxu0 0.0
    %262 = vmatprep.subr.mxu0 0.0
    %263 = vmatpush1.msra.mxu0 0.0
    %264 = vmatprep.subr.mxu0 0.0
    %265 = vmatpush1.msra.mxu0 0.0
    %266 = vmatprep.subr.mxu0 0.0
    %267 = vmatpush1.msra.mxu0 0.0
    %268 = vmatprep.subr.mxu0 0.0
    %269 = vmatpush1.msra.mxu0 0.0
    %270 = vmatprep.subr.mxu0 0.0
    %271 = vmatpush1.msra.mxu0 0.0
    %272 = vmatprep.subr.mxu0 0.0
    %273 = vmatpush1.msra.mxu0 0.0
    %274 = vmatprep.mubr.f32.mxu0 0.0
    %275 = vmatmul.mubr.f32.gmra.mrb[0].mxu0 %v208
    %v276 = vpop.f32.mrb[0].mxu0
    %v277 = vadd.f32 %v205, %v276
    %v278 = vpop.f32.mrb[0].mxu0
    %279 = vdwg.mxu0
    %v280 = vmul.f32 %v277, %v277
    %vm281 = vcmask 254976
    %v282 = vsel %vm281, %v280, 0.0
    %283 = vadd.xlane.f32.xlu0 %v282
    %v284 = vpop.xlane.xlu0 %283
    %v285 = vmax.f32 %v284, 1e-24
    %v286 = vrsqrt.pop %v285
    %v287 = vmul.f32 %v277, %v286
    %v288 = vadd.f32 %v103, %v104
    %289 = vadd.xlane.f32.xlu0 %v288
    %v290 = vpop.xlane.xlu0 %289
    %v291 = vrcp.pop 256.0
    %v292 = vmul.f32 %v290, %v291
    %v293 = vld [vmem:[#allocation9] sm:$0xff]
    %v294 = vmul.f32 %v292, %v293
    %v295 = vld [vmem:[#allocation11] sm:$0x1]
    %v297 = vlaneseq
    %v298 = vshrl.u32 %v297, 7
    %v299 = vsub.s32 0, %v298
    %v300 = vrot.slane %v295, %v299
    %302 = vmatprep.subr.mxu0 0.0
    %303 = vmatpush1.msra.mxu0 %v294
    %304 = vmatprep.subr.mxu0 0.0
    %305 = vmatpush1.msra.mxu0 0.0
    %306 = vmatprep.subr.mxu0 0.0
    %307 = vmatpush1.msra.mxu0 0.0
    %308 = vmatprep.subr.mxu0 0.0
    %309 = vmatpush1.msra.mxu0 0.0
    %310 = vmatprep.subr.mxu0 0.0
    %311 = vmatpush1.msra.mxu0 0.0
    %312 = vmatprep.subr.mxu0 0.0
    %313 = vmatpush1.msra.mxu0 0.0
    %314 = vmatprep.subr.mxu0 0.0
    %315 = vmatpush1.msra.mxu0 0.0
    %316 = vmatprep.subr.mxu0 0.0
    %317 = vmatpush1.msra.mxu0 0.0
    %318 = vmatprep.subr.mxu0 0.0
    %319 = vmatpush1.msra.mxu0 0.0
    %320 = vmatprep.subr.mxu0 0.0
    %321 = vmatpush1.msra.mxu0 0.0
    %322 = vmatprep.subr.mxu0 0.0
    %323 = vmatpush1.msra.mxu0 0.0
    %324 = vmatprep.subr.mxu0 0.0
    %325 = vmatpush1.msra.mxu0 0.0
    %326 = vmatprep.subr.mxu0 0.0
    %327 = vmatpush1.msra.mxu0 0.0
    %328 = vmatprep.subr.mxu0 0.0
    %329 = vmatpush1.msra.mxu0 0.0
    %330 = vmatprep.subr.mxu0 0.0
    %331 = vmatpush1.msra.mxu0 0.0
    %332 = vmatprep.subr.mxu0 0.0
    %333 = vmatpush1.msra.mxu0 0.0
    %334 = vmatprep.subr.mxu0 0.0
    %335 = vmatpush1.msra.mxu0 0.0
    %336 = vmatprep.subr.mxu0 0.0
    %337 = vmatpush1.msra.mxu0 0.0
    %338 = vmatprep.subr.mxu0 0.0
    %339 = vmatpush1.msra.mxu0 0.0
    %340 = vmatprep.subr.mxu0 0.0
    %341 = vmatpush1.msra.mxu0 0.0
    %342 = vmatprep.subr.mxu0 0.0
    %343 = vmatpush1.msra.mxu0 0.0
    %344 = vmatprep.subr.mxu0 0.0
    %345 = vmatpush1.msra.mxu0 0.0
    %346 = vmatprep.subr.mxu0 0.0
    %347 = vmatpush1.msra.mxu0 0.0
    %348 = vmatprep.subr.mxu0 0.0
    %349 = vmatpush1.msra.mxu0 0.0
    %350 = vmatprep.subr.mxu0 0.0
    %351 = vmatpush1.msra.mxu0 0.0
    %352 = vmatprep.subr.mxu0 0.0
    %353 = vmatpush1.msra.mxu0 0.0
    %354 = vmatprep.subr.mxu0 0.0
    %355 = vmatpush1.msra.mxu0 0.0
    %356 = vmatprep.subr.mxu0 0.0
    %357 = vmatpush1.msra.mxu0 0.0
    %358 = vmatprep.subr.mxu0 0.0
    %359 = vmatpush1.msra.mxu0 0.0
    %360 = vmatprep.subr.mxu0 0.0
    %361 = vmatpush1.msra.mxu0 0.0
    %362 = vmatprep.subr.mxu0 0.0
    %363 = vmatpush1.msra.mxu0 0.0
    %364 = vmatprep.subr.mxu0 0.0
    %365 = vmatpush1.msra.mxu0 0.0
    %366 = vmatprep.mubr.f32.mxu0 0.0
    %367 = vmatmul.mubr.f32.gmra.mrb[0].mxu0 %v208
    %v368 = vpop.f32.mrb[0].mxu0
    %v369 = vadd.f32 %v300, %v368
    %v370 = vpop.f32.mrb[0].mxu0
    %371 = vdwg.mxu0
    %v372 = vmul.f32 %v369, %v369
    %v373 = vsel %vm281, %v372, 0.0
    %374 = vadd.xlane.f32.xlu0 %v373
    %v375 = vpop.xlane.xlu0 %374
    %v376 = vmax.f32 %v375, 1e-24
    %v377 = vrsqrt.pop %v376
    %v378 = vmul.f32 %v369, %v377
    %379 = vst.msk [vmem:[#allocation12] sm:$0x3] %vm281, %v378
    %v380 = vmul.f32 %v287, %v378
    %v381 = vsel %vm281, %v380, 0.0
    %382 = vadd.xlane.f32.xlu0 %v381
    %v383 = vpop.xlane.xlu0 %382
    %v384 = vmul.f32 %v383, 14.285714
    %v385 = vld [vmem:[%s10] sm:$0xff]
    %v386 = vld [vmem:[%s10 + $0x8] sm:$0xff]
    %vm387 = vcmask 261120
    %v389 = vsel %vm387, %v287, 0
    %v392 = vsel %vm387, %v385, 0
    %v395 = vsel %vm387, %v386, 0
    %397 = vmatprep.subr.mxu0 0.0
    %398 = vmatpush1.xpose.msra.mxu0 %v392
    %399 = vmatprep.subr.mxu0 0.0
    %400 = vmatpush1.xpose.msra.mxu0 %v395
    %401 = vmatprep.subr.mxu0 0.0
    %402 = vmatpush1.xpose.msra.mxu0 0.0
    %403 = vmatprep.subr.mxu0 0.0
    %404 = vmatpush1.xpose.msra.mxu0 0.0
    %405 = vmatprep.subr.mxu0 0.0
    %406 = vmatpush1.xpose.msra.mxu0 0.0
    %407 = vmatprep.subr.mxu0 0.0
    %408 = vmatpush1.xpose.msra.mxu0 0.0
    %409 = vmatprep.subr.mxu0 0.0
    %410 = vmatpush1.xpose.msra.mxu0 0.0
    %411 = vmatprep.subr.mxu0 0.0
    %412 = vmatpush1.xpose.msra.mxu0 0.0
    %413 = vmatprep.subr.mxu0 0.0
    %414 = vmatpush1.xpose.msra.mxu0 0.0
    %415 = vmatprep.subr.mxu0 0.0
    %416 = vmatpush1.xpose.msra.mxu0 0.0
    %417 = vmatprep.subr.mxu0 0.0
    %418 = vmatpush1.xpose.msra.mxu0 0.0
    %419 = vmatprep.subr.mxu0 0.0
    %420 = vmatpush1.xpose.msra.mxu0 0.0
    %421 = vmatprep.subr.mxu0 0.0
    %422 = vmatpush1.xpose.msra.mxu0 0.0
    %423 = vmatprep.subr.mxu0 0.0
    %424 = vmatpush1.xpose.msra.mxu0 0.0
    %425 = vmatprep.subr.mxu0 0.0
    %426 = vmatpush1.xpose.msra.mxu0 0.0
    %427 = vmatprep.subr.mxu0 0.0
    %428 = vmatpush1.xpose.msra.mxu0 0.0
    %429 = vmatprep.subr.mxu0 0.0
    %430 = vmatpush1.xpose.msra.mxu0 0.0
    %431 = vmatprep.subr.mxu0 0.0
    %432 = vmatpush1.xpose.msra.mxu0 0.0
    %433 = vmatprep.subr.mxu0 0.0
    %434 = vmatpush1.xpose.msra.mxu0 0.0
    %435 = vmatprep.subr.mxu0 0.0
    %436 = vmatpush1.xpose.msra.mxu0 0.0
    %437 = vmatprep.subr.mxu0 0.0
    %438 = vmatpush1.xpose.msra.mxu0 0.0
    %439 = vmatprep.subr.mxu0 0.0
    %440 = vmatpush1.xpose.msra.mxu0 0.0
    %441 = vmatprep.subr.mxu0 0.0
    %442 = vmatpush1.xpose.msra.mxu0 0.0
    %443 = vmatprep.subr.mxu0 0.0
    %444 = vmatpush1.xpose.msra.mxu0 0.0
    %445 = vmatprep.subr.mxu0 0.0
    %446 = vmatpush1.xpose.msra.mxu0 0.0
    %447 = vmatprep.subr.mxu0 0.0
    %448 = vmatpush1.xpose.msra.mxu0 0.0
    %449 = vmatprep.subr.mxu0 0.0
    %450 = vmatpush1.xpose.msra.mxu0 0.0
    %451 = vmatprep.subr.mxu0 0.0
    %452 = vmatpush1.xpose.msra.mxu0 0.0
    %453 = vmatprep.subr.mxu0 0.0
    %454 = vmatpush1.xpose.msra.mxu0 0.0
    %455 = vmatprep.subr.mxu0 0.0
    %456 = vmatpush1.xpose.msra.mxu0 0.0
    %457 = vmatprep.subr.mxu0 0.0
    %458 = vmatpush1.xpose.msra.mxu0 0.0
    %459 = vmatprep.subr.mxu0 0.0
    %460 = vmatpush1.xpose.msra.mxu0 0.0
    %461 = vmatprep.mubr.f32.mxu0 0.0
    %462 = vmatmul.mubr.f32.gmra.mrb[0].mxu0 %v389
    %v463 = vpop.f32.mrb[0].mxu0
    %v464 = vadd.f32 0.0, %v463
    %v465 = vpop.f32.mrb[0].mxu0
    %466 = vdwg.mxu0
    %v467 = vmul.f32 %v464, 14.285714
    %vm468 = vcmask 123904
    %v469 = vsel %vm468, %v467, -inf
    %470 = vmax.xlane.f32.xlu0 %v469
    %v471 = vpop.xlane.xlu0 %470
    %v472 = vmax.f32 %v384, %v471
    %v473 = vsub.f32 %v384, %v472
    %v474 = vmul.f32 %v473, 1.442695
    %v475 = vpow.pop %v474
    %v476 = vsub.f32 %v467, %v472
    %v477 = vmul.f32 %v476, 1.442695
    %v478 = vpow.pop %v477
    %v479 = vsel %vm468, %v478, 0.0
    %480 = vadd.xlane.f32.xlu0 %v479
    %v481 = vpop.xlane.xlu0 %480
    %v482 = vadd.f32 %v475, %v481
    %v483 = vlog2.pop %v482
    %v484 = vmul.f32 %v483, 0.6931472
    %v485 = vadd.f32 %v472, %v484
    %v486 = vsub.f32 %v485, %v384
    %vm487 = vcmask 1024
    %v488 = vsel %vm487, %v486, 0.0
    %489 = vadd.xlane.f32.xlu0 %v488
    %v490 = vpop.xlane.xlu0 %489
    %v491 = vrot.slane %v490, 4
    %v492 = vadd.f32 %v490, %v491
    %v493 = vrot.slane %v492, 2
    %v494 = vadd.f32 %v492, %v493
    %v495 = vrot.slane %v494, 1
    %v496 = vadd.f32 %v494, %v495
    %s497 = vtos %v496
    %v498 = vstv %s497
    %v499 = vmul.f32 %v498, 0.5
    %v500 = vand.u32 2147483647, %v188
    %v501 = vsub.f32 0.0, %v500
    %v502 = vmul.f32 %v501, 1.442695
    %v503 = vpow.pop %v502
    %v504 = vadd.f32 %v503, 1.0
    %v505 = vlog2.pop %v504
    %v506 = vmul.f32 %v505, 0.6931472
    %v507 = vmul.f32 -0.5, %v503
    %v508 = vadd.f32 %v507, 1.0
    %v509 = vmul.f32 %v508, %v503
    %v510 = vand.u32 2147483647, %v503
    %vm511 = vcmp.lt.f32.partialorder %v510, 0.0004427343
    %v512 = vsel %vm511, %v509, %v506
    %v513 = vmax.f32 %v188, 0.0
    %v514 = vmul.f32 %v188, %v105
    %v515 = vsub.f32 %v513, %v514
    %v516 = vadd.f32 %v515, %v512
    %v517 = vadd.f32 %v503, 1.0
    %v518 = vrcp.pop %v517
    %vm519 = vcmp.ge.f32.partialorder %v188, 0.0
    %v520 = vmul.f32 %v503, %v518
    %v521 = vsel %vm519, %v518, %v520
    %v522 = vsel %vm468, %v516, 0.0
    %523 = vadd.xlane.f32.xlu0 %v522
    %v524 = vpop.xlane.xlu0 %523
    %v525 = vrot.slane %v524, 4
    %v526 = vadd.f32 %v524, %v525
    %v527 = vrot.slane %v526, 2
    %v528 = vadd.f32 %v526, %v527
    %v529 = vrot.slane %v528, 1
    %v530 = vadd.f32 %v528, %v529
    %s531 = vtos %v530
    %v532 = vstv %s531
    %v533 = vmul.f32 %v521, %v105
    %v534 = vsel %vm468, %v533, 0.0
    %535 = vadd.xlane.f32.xlu0 %v534
    %v536 = vpop.xlane.xlu0 %535
    %v537 = vrot.slane %v536, 4
    %v538 = vadd.f32 %v536, %v537
    %v539 = vrot.slane %v538, 2
    %v540 = vadd.f32 %v538, %v539
    %v541 = vrot.slane %v540, 1
    %v542 = vadd.f32 %v540, %v541
    %s543 = vtos %v542
    %v544 = vstv %s543
    %v545 = vsub.f32 1.0, %v105
    %v546 = vmul.f32 %v545, %v521
    %v547 = vsel %vm468, %v546, 0.0
    %548 = vadd.xlane.f32.xlu0 %v547
    %v549 = vpop.xlane.xlu0 %548
    %v550 = vrot.slane %v549, 4
    %v551 = vadd.f32 %v549, %v550
    %v552 = vrot.slane %v551, 2
    %v553 = vadd.f32 %v551, %v552
    %v554 = vrot.slane %v553, 1
    %v555 = vadd.f32 %v553, %v554
    %s556 = vtos %v555
    %v557 = vstv %s556
    %v558 = vsub.f32 1.0, %v521
    %v559 = vmul.f32 %v105, %v558
    %v560 = vsel %vm468, %v559, 0.0
    %561 = vadd.xlane.f32.xlu0 %v560
    %v562 = vpop.xlane.xlu0 %561
    %v563 = vrot.slane %v562, 4
    %v564 = vadd.f32 %v562, %v563
    %v565 = vrot.slane %v564, 2
    %v566 = vadd.f32 %v564, %v565
    %v567 = vrot.slane %v566, 1
    %v568 = vadd.f32 %v566, %v567
    %s569 = vtos %v568
    %v570 = vstv %s569
    %vm571 = vcmask 7168
    %v572 = vsel %vm571, %v532, %v544
    %vm573 = vcmask 15360
    %v574 = vsel %vm573, %v572, %v557
    %vm575 = vcmask 23552
    %v576 = vsel %vm575, %v574, %v570
    %vm577 = vcmask 31744
    %v578 = vsel %vm577, %v576, %v499
    %vm579 = vcmask 39936
    %v580 = vsel %vm579, %v578, 0.0
    %581 = vst [vmem:[#allocation13] sm:$0x1] %v580
    // Predicated region
    $region66: #{tpu_custom_call.1} parent=1 // pred_check
      _
    $region67: #{tpu_custom_call.1} parent=1 // pred_check_branch
      %583 = sbr.rel (0) target = $region69
    $region68: #{tpu_custom_call.1} parent=1 // pred_region
      %s585 = ssub.s32 32, 32
      %586 = vsyncadd [#allocation5], %s585
      %s588 = sshll.u32 [#allocation12], 4
      %s589 = int_to_ptr.vmem [resolvable:$true] %s588
      %591 = dma.vmem_to_hbm [thread:$0]  %s589, 32, %s11, [#allocation5]
    $region69: #{tpu_custom_call.1} parent=1 // pred_fallthru
      _
    // Predicated region
    $region70: #{tpu_custom_call.1} parent=1 // pred_check
      _
    $region71: #{tpu_custom_call.1} parent=1 // pred_check_branch
      %593 = sbr.rel (0) target = $region73
    $region72: #{tpu_custom_call.1} parent=1 // pred_region
      %s595 = ssub.s32 16, 16
      %596 = vsyncadd [#allocation14], %s595
      %s598 = sshll.u32 [#allocation13], 4
      %s599 = int_to_ptr.vmem [resolvable:$true] %s598
      %601 = dma.vmem_to_hbm [thread:$0]  %s599, 16, %s12, [#allocation14]
    $region73: #{tpu_custom_call.1} parent=1 // pred_fallthru
      _
    // Predicated region
    $region74: #{tpu_custom_call.1} parent=1 // pred_check
      _
    $region75: #{tpu_custom_call.1} parent=1 // pred_check_branch
      %603 = sbr.rel (0) target = $region77
    $region76: #{tpu_custom_call.1} parent=1 // pred_region
      %604 = dma.done [#allocation5], 32
    $region77: #{tpu_custom_call.1} parent=1 // pred_fallthru
      _
    // Predicated region
    $region78: #{tpu_custom_call.1} parent=1 // pred_check
      _
    $region79: #{tpu_custom_call.1} parent=1 // pred_check_branch
      %606 = sbr.rel (0) target = $region81
    $region80: #{tpu_custom_call.1} parent=1 // pred_region
      %607 = dma.done [#allocation14], 16
    $region81: #{tpu_custom_call.1} parent=1 // pred_fallthru
      _
    %608 = vsyncpa [#allocation4], 1
    %609 = vsyncpa [#allocation7], 1
    %610 = vsyncpa [#allocation10], 1
    %611 = vsyncpa [#allocation5], 1
    %612 = vsyncpa [#allocation14], 1

</llo_original>
